<compile_context>
chip_gen: v5e
topology: v5e:2x2
jax: 0.10.0
libtpu: 0.0.40
codegen_flags: <defaults>
</compile_context>

<pallas_src>
import math
from functools import partial

import jax
import jax.numpy as jnp
from jax.experimental import pallas as pl
from jax.experimental.pallas import tpu as pltpu


def ds_conv_kernel(x_ref, carry_ref, dw_ref, pw_ref, b_ref, mask_ref, o_ref,
                   *, W, shifted, pad_blk, pad_off):
    # x_ref    : (1, C, TB)    input slab, flat row-aligned spatial lanes (TB % W == 0)
    # carry_ref: (1, 1, C, W)  input row just above this output block (zeros for block 0)
    # dw_ref   : (C, 3)        per-channel depthwise taps (f32)
    # pw_ref   : (out_C, C)    pointwise weight (f32)
    # b_ref    : (out_C, 1)    fused bias = pw @ dw_bias + pw_bias (f32)
    # mask_ref : (2, TB)       resident row-boundary masks: [0]: w != 0, [1]: w != W-1
    # o_ref    : (1, out_C, TB) output slab over the H-padded spatial extent
    x = x_ref[0].astype(jnp.float32)                       # (C, TB), f32 compute
    C, TB = x.shape

    if shifted:
        # Output lane j of this block lives at H-padded row (block_row + j//W);
        # its source input row is one row earlier, so shift the slab down by
        # one image row and feed the first row from the carry (the last row of
        # the previous input block; zeros for the very first block, which makes
        # the top H-pad row come out as pure bias with no special case).
        carry = carry_ref[0, 0].astype(jnp.float32)        # (C, W)
        if TB == W:
            x_sh = carry
        else:
            x_sh = jnp.concatenate([carry, x[:, : TB - W]], axis=1)
    else:
        # Fallback path: the input was already H-padded in the wrapper.
        x_sh = x

    # 3-tap depthwise conv along W (padding=1).  The resident {0,1} masks zero
    # exactly the lanes that would leak across an image-row boundary
    # (w==0 for the w-1 tap, w==W-1 for the w+1 tap) -- no per-step iota/%/cmp.
    m = mask_ref[...]                                      # (2, TB)
    zcol = jnp.zeros((C, 1), x_sh.dtype)
    x_m1 = jnp.concatenate([zcol, x_sh[:, : TB - 1]], axis=1) * m[0:1, :]
    x_p1 = jnp.concatenate([x_sh[:, 1:TB], zcol], axis=1) * m[1:2, :]

    taps = dw_ref[...]                                     # (C, 3)
    y = (x_m1 * taps[:, 0:1]
         + x_sh * taps[:, 1:2]
         + x_p1 * taps[:, 2:3])                            # (C, TB)

    # Fused pointwise 1x1 conv on the MXU: (out_C, C) @ (C, TB) -> (out_C, TB).
    # Lane dim of the store is TB (128-multiple / full extent) -> lane-dense.
    out = jnp.dot(pw_ref[...], y, preferred_element_type=jnp.float32) + b_ref[...]
    o_ref[0] = out.astype(o_ref.dtype)

    # Bottom H-pad row (padded row H+1) has no valid source row -> pure bias.
    # Only one grid step per batch image takes this (tiny, masked) store.
    @pl.when(pl.program_id(1) == pad_blk)
    def _():
        o_ref[0, :, pl.ds(pad_off, W)] = jnp.broadcast_to(
            b_ref[...], (b_ref.shape[0], W)).astype(o_ref.dtype)


def _pick_spatial_tile(W, in_flat, chan_rows, budget_bytes):
    """Flat spatial tile TB: a multiple of lcm(W, 128) (row-aligned AND
    lane-dense stores), no larger than the input's flat extent, sized so the
    double-buffered f32 streaming footprint (~2 * chan_rows * TB * 4 B) stays
    around `budget_bytes` (~8-12 MiB of HBM traffic per grid step).
    Returns None when no lane-aligned tile fits (tiny / awkward spatial
    extents) -> caller falls back to a single full-extent block."""
    unit = (W * 128) // math.gcd(W, 128)                   # lcm(W, 128)
    if unit > in_flat:
        return None
    tgt = max(unit, budget_bytes // (4 * 2 * max(chan_rows, 1)))
    tb = (tgt // unit) * unit
    return max(unit, min(tb, (in_flat // unit) * unit))


def depth_separate_conv(x, dw_w, dw_b, pw_w, pw_b, *, tile_budget_bytes=24 << 20):
    """x: (N, C, H, W) NCHW.  Returns (N, out_C, H+2, W) NCHW, matching PyTorch
    Conv2d(C, C, k=(1,3), padding=1, groups=C) followed by Conv2d(C, out_C, 1)."""
    N, C, H, W = x.shape
    out_C = pw_w.shape[0]
    Hp = H + 2
    pad_flat = Hp * W
    in_flat = H * W

    dw = dw_w.reshape(C, 3).astype(jnp.float32)            # per-channel taps
    pw = pw_w.reshape(out_C, C).astype(jnp.float32)
    dwb = dw_b.astype(jnp.float32)
    pwb = pw_b.astype(jnp.float32)

    # Pack pairs of batch images onto the channel (sublane) axis while the
    # per-image channel count underfills the 8-sublane f32 tile: halves VALU
    # issue count per useful element.  Pure wrapper-side (free, contiguous)
    # reshapes; the pointwise weight becomes block-diagonal.
    pack = 1
    while C * pack * 2 <= 8 and N % (pack * 2) == 0:
        pack *= 2
    Np, Cp, OCp = N // pack, C * pack, out_C * pack
    xp = x.reshape(Np, Cp, H, W)
    if pack > 1:
        dw = jnp.tile(dw, (pack, 1))                                  # (Cp, 3)
        pw = jnp.kron(jnp.eye(pack, dtype=pw.dtype), pw)              # (OCp, Cp)
        dwb = jnp.tile(dwb, pack)
        pwb = jnp.tile(pwb, pack)
    fused_b = (pwb + pw @ dwb).reshape(OCp, 1)             # fold depthwise bias in

    TB = _pick_spatial_tile(W, in_flat, Cp + OCp + 2, tile_budget_bytes)
    if TB is None:
        # TODO(synk): tiny/odd spatial extents (< lcm(W,128)) keep the old
        # padded-copy path (single full-extent block); negligible at such sizes.
        shifted = False
        TB = pad_flat
        x_op = jnp.pad(xp, ((0, 0), (0, 0), (1, 1), (0, 0))).reshape(Np, Cp, pad_flat)
        carry = jnp.zeros((Np, 1, Cp, W), x.dtype)
        n_sb = 1
        in_blocks = 1
    else:
        shifted = True
        x_op = xp.reshape(Np, Cp, in_flat)                 # free reshape, NO pad copy
        n_sb = pl.cdiv(pad_flat, TB)
        in_blocks = pl.cdiv(in_flat, TB)
        RB = TB // W                                       # rows per block
        # carry[n, s] = input row (s*RB - 1): the single row each output block
        # needs from above its own input slab (zeros for s == 0 -> the top
        # H-pad row is emitted as pure bias).  Tiny: Np*n_sb*Cp*W elements.
        row_idx = jnp.clip(jnp.arange(n_sb) * RB - 1, 0, H - 1)
        carry = jnp.take(xp, row_idx, axis=2)              # (Np, Cp, n_sb, W)
        carry = carry * (jnp.arange(n_sb) > 0).astype(carry.dtype)[None, None, :, None]
        carry = carry.transpose(0, 2, 1, 3)                # (Np, n_sb, Cp, W)

    # Resident W-boundary masks (constant index_map -> fetched once).
    lanes = jnp.arange(TB, dtype=jnp.int32) % W
    masks = jnp.stack([(lanes != 0), (lanes != W - 1)]).astype(jnp.float32)  # (2, TB)

    # Static location of the bottom H-pad row in padded-flat coordinates.
    pad_blk = ((H + 1) * W) // TB
    pad_off = (H + 1) * W - pad_blk * TB

    # Explicit scoped-VMEM budget (v5e default is only 16 MiB; cap below v7x's
    # 64 MiB physical VMEM).
    vmem_need = 2 * 4 * (Cp + OCp + 2) * TB + 2 * 4 * Cp * W + (1 << 20)
    vmem_limit = int(min(max(32 << 20, 2 * vmem_need), 56 << 20))

    out_flat = pl.pallas_call(
        partial(ds_conv_kernel, W=W, shifted=shifted, pad_blk=pad_blk, pad_off=pad_off),
        out_shape=jax.ShapeDtypeStruct((Np, OCp, pad_flat), x.dtype),
        grid=(Np, n_sb),
        in_specs=[
            pl.BlockSpec((1, Cp, TB),
                         lambda n, s: (n, 0, jnp.minimum(s, in_blocks - 1))),
            pl.BlockSpec((1, 1, Cp, W), lambda n, s: (n, s, 0, 0)),
            pl.BlockSpec((Cp, 3), lambda n, s: (0, 0)),
            pl.BlockSpec((OCp, Cp), lambda n, s: (0, 0)),
            pl.BlockSpec((OCp, 1), lambda n, s: (0, 0)),
            pl.BlockSpec((2, TB), lambda n, s: (0, 0)),
        ],
        out_specs=pl.BlockSpec((1, OCp, TB), lambda n, s: (n, 0, s)),
        compiler_params=pltpu.CompilerParams(
            dimension_semantics=("parallel", "parallel"),
            vmem_limit_bytes=vmem_limit),
    )(x_op, carry, dw, pw, fused_b, masks)

    # Free reshapes: unpack batch images and restore NCHW.
    return out_flat.reshape(N, out_C, Hp, W)


def reference(x, dw_w, dw_b, pw_w, pw_b):
    """Plain-JAX reference matching PyTorch semantics."""
    C = x.shape[1]
    y = jax.lax.conv_general_dilated(
        x, dw_w, window_strides=(1, 1), padding=((1, 1), (1, 1)),
        dimension_numbers=("NCHW", "OIHW", "NCHW"),
        feature_group_count=C)
    y = y + dw_b[None, :, None, None]
    z = jax.lax.conv_general_dilated(
        y, pw_w, window_strides=(1, 1), padding=((0, 0), (0, 0)),
        dimension_numbers=("NCHW", "OIHW", "NCHW"))
    return z + pw_b[None, :, None, None]


def _run_case(key, N, C, H, W, out_C):
    kx, k1, k2, k3, k4 = jax.random.split(key, 5)
    x = jax.random.normal(kx, (N, C, H, W), dtype=jnp.float32)
    dw_w = jax.random.normal(k1, (C, 1, 1, 3), dtype=jnp.float32) * 0.3
    dw_b = jax.random.normal(k2, (C,), dtype=jnp.float32) * 0.1
    pw_w = jax.random.normal(k3, (out_C, C, 1, 1), dtype=jnp.float32) * 0.3
    pw_b = jax.random.normal(k4, (out_C,), dtype=jnp.float32) * 0.1

    out = jax.block_until_ready(depth_separate_conv(x, dw_w, dw_b, pw_w, pw_b))
    ref = jax.block_until_ready(reference(x, dw_w, dw_b, pw_w, pw_b))

    assert out.shape == (N, out_C, H + 2, W), out.shape
    assert jnp.allclose(out, ref, atol=1e-4, rtol=1e-4), \
        float(jnp.max(jnp.abs(out - ref)))


if __name__ == "__main__":
    key = jax.random.PRNGKey(0)
    k_main, k_small = jax.random.split(key)

    # Main path: unpadded streaming input + carry row, 2 spatial blocks,
    # batch packing (C=4 -> 8 packed channels).
    _run_case(k_main, N=2, C=4, H=16, W=16, out_C=8)

    # Fallback path: spatial extent smaller than lcm(W,128) -> single
    # full-extent block (still packed).
    _run_case(k_small, N=2, C=3, H=4, W=16, out_C=5)

    print("KERNEL_OK")
</pallas_src>

<mosaic_0001>
module attributes {stable_mosaic.version = 11 : i64} {
  func.func @ds_conv_kernel(%arg0: i32, %arg1: i32, %arg2: memref<1x8x256xf32, #tpu.memory_space<vmem>>, %arg3: memref<1x1x8x16xf32, #tpu.memory_space<vmem>>, %arg4: memref<8x3xf32, #tpu.memory_space<vmem>>, %arg5: memref<16x8xf32, #tpu.memory_space<vmem>>, %arg6: memref<16x1xf32, #tpu.memory_space<vmem>>, %arg7: memref<2x256xf32, #tpu.memory_space<vmem>>, %arg8: memref<1x16x256xf32, #tpu.memory_space<vmem>>) attributes {dimension_semantics = [#tpu.dimension_semantics<parallel>, #tpu.dimension_semantics<parallel>], iteration_bounds = array<i64: 1, 2>, scalar_prefetch = 0 : i64, scratch_operands = 0 : i64, tpu.core_type = #tpu.core_type<tc>, window_params = [{transform_indices = @transform_0, window_bounds = array<i64: 1, 8, 256>}, {transform_indices = @transform_1, window_bounds = array<i64: 1, 1, 8, 16>}, {pipeline_mode = #tpu.pipeline_mode<synchronous>, transform_indices = @transform_2, window_bounds = array<i64: 8, 3>}, {pipeline_mode = #tpu.pipeline_mode<synchronous>, transform_indices = @transform_3, window_bounds = array<i64: 16, 8>}, {pipeline_mode = #tpu.pipeline_mode<synchronous>, transform_indices = @transform_4, window_bounds = array<i64: 16, 1>}, {pipeline_mode = #tpu.pipeline_mode<synchronous>, transform_indices = @transform_5, window_bounds = array<i64: 2, 256>}, {transform_indices = @transform_6, window_bounds = array<i64: 1, 16, 256>}]} {
    %c0 = arith.constant 0 : index
    %c0_0 = arith.constant 0 : index
    %c0_1 = arith.constant 0 : index
    %0 = vector.load %arg2[%c0, %c0_0, %c0_1] : memref<1x8x256xf32, #tpu.memory_space<vmem>>, vector<1x8x256xf32>
    %1 = vector.shape_cast %0 : vector<1x8x256xf32> to vector<8x256xf32>
    %c0_2 = arith.constant 0 : index
    %c0_3 = arith.constant 0 : index
    %c0_4 = arith.constant 0 : index
    %c0_5 = arith.constant 0 : index
    %2 = vector.load %arg3[%c0_2, %c0_3, %c0_4, %c0_5] : memref<1x1x8x16xf32, #tpu.memory_space<vmem>>, vector<1x1x8x16xf32>
    %3 = vector.shape_cast %2 : vector<1x1x8x16xf32> to vector<8x16xf32>
    %4 = vector.extract_strided_slice %1 {offsets = [0, 0], sizes = [8, 240], strides = [1, 1]} : vector<8x256xf32> to vector<8x240xf32>
    %5 = tpu.concatenate %3, %4 in 1 : vector<8x16xf32>, vector<8x240xf32> -> vector<8x256xf32>
    %c0_6 = arith.constant 0 : index
    %c0_7 = arith.constant 0 : index
    %6 = vector.load %arg7[%c0_6, %c0_7] : memref<2x256xf32, #tpu.memory_space<vmem>>, vector<2x256xf32>
    %cst = arith.constant 0.000000e+00 : f32
    %7 = vector.broadcast %cst : f32 to vector<8x1xf32>
    %8 = vector.extract_strided_slice %5 {offsets = [0, 0], sizes = [8, 255], strides = [1, 1]} : vector<8x256xf32> to vector<8x255xf32>
    %9 = tpu.concatenate %7, %8 in 1 : vector<8x1xf32>, vector<8x255xf32> -> vector<8x256xf32>
    %10 = vector.extract_strided_slice %6 {offsets = [0, 0], sizes = [1, 256], strides = [1, 1]} : vector<2x256xf32> to vector<1x256xf32>
    %11 = vector.broadcast %10 : vector<1x256xf32> to vector<8x256xf32>
    %12 = arith.mulf %9, %11 : vector<8x256xf32>
    %13 = vector.extract_strided_slice %5 {offsets = [0, 1], sizes = [8, 255], strides = [1, 1]} : vector<8x256xf32> to vector<8x255xf32>
    %14 = tpu.concatenate %13, %7 in 1 : vector<8x255xf32>, vector<8x1xf32> -> vector<8x256xf32>
    %15 = vector.extract_strided_slice %6 {offsets = [1, 0], sizes = [1, 256], strides = [1, 1]} : vector<2x256xf32> to vector<1x256xf32>
    %16 = vector.broadcast %15 : vector<1x256xf32> to vector<8x256xf32>
    %17 = arith.mulf %14, %16 : vector<8x256xf32>
    %c0_8 = arith.constant 0 : index
    %c0_9 = arith.constant 0 : index
    %18 = vector.load %arg4[%c0_8, %c0_9] : memref<8x3xf32, #tpu.memory_space<vmem>>, vector<8x3xf32>
    %19 = vector.extract_strided_slice %18 {offsets = [0, 0], sizes = [8, 1], strides = [1, 1]} : vector<8x3xf32> to vector<8x1xf32>
    %20 = vector.broadcast %19 : vector<8x1xf32> to vector<8x256xf32>
    %21 = arith.mulf %12, %20 : vector<8x256xf32>
    %22 = vector.extract_strided_slice %18 {offsets = [0, 1], sizes = [8, 1], strides = [1, 1]} : vector<8x3xf32> to vector<8x1xf32>
    %23 = vector.broadcast %22 : vector<8x1xf32> to vector<8x256xf32>
    %24 = arith.mulf %5, %23 : vector<8x256xf32>
    %25 = arith.addf %21, %24 : vector<8x256xf32>
    %26 = vector.extract_strided_slice %18 {offsets = [0, 2], sizes = [8, 1], strides = [1, 1]} : vector<8x3xf32> to vector<8x1xf32>
    %27 = vector.broadcast %26 : vector<8x1xf32> to vector<8x256xf32>
    %28 = arith.mulf %17, %27 : vector<8x256xf32>
    %29 = arith.addf %25, %28 : vector<8x256xf32>
    %c0_10 = arith.constant 0 : index
    %c0_11 = arith.constant 0 : index
    %30 = vector.load %arg5[%c0_10, %c0_11] : memref<16x8xf32, #tpu.memory_space<vmem>>, vector<16x8xf32>
    %cst_12 = arith.constant dense<0.000000e+00> : vector<16x256xf32>
    %31 = tpu.matmul %30, %29, %cst_12 {dimension_numbers = #tpu.dot_dimension_numbers<[1], [0], [0], [1], [0, 0, 1, 1], [], []>} : vector<16x8xf32>, vector<8x256xf32>, vector<16x256xf32> -> vector<16x256xf32>
    %c0_13 = arith.constant 0 : index
    %c0_14 = arith.constant 0 : index
    %32 = vector.load %arg6[%c0_13, %c0_14] : memref<16x1xf32, #tpu.memory_space<vmem>>, vector<16x1xf32>
    %33 = vector.broadcast %32 : vector<16x1xf32> to vector<16x256xf32>
    %34 = arith.addf %31, %33 : vector<16x256xf32>
    %c0_15 = arith.constant 0 : index
    %c0_16 = arith.constant 0 : index
    %c0_17 = arith.constant 0 : index
    %35 = vector.load %arg8[%c0_15, %c0_16, %c0_17] : memref<1x16x256xf32, #tpu.memory_space<vmem>>, vector<1x16x256xf32>
    %36 = vector.shape_cast %35 : vector<1x16x256xf32> to vector<16x256xf32>
    %37 = vector.shape_cast %34 : vector<16x256xf32> to vector<1x16x256xf32>
    tpu.vector_store %arg8[%c0_15, %c0_16, %c0_17], %37 {strides = array<i32>} : memref<1x16x256xf32, #tpu.memory_space<vmem>>, vector<1x16x256xf32>,
    %c1_i32 = arith.constant 1 : i32
    %38 = arith.cmpi eq, %arg1, %c1_i32 : i32
    %39 = arith.extui %38 : i1 to i32
    %c0_i32 = arith.constant 0 : i32
    %40 = arith.cmpi ne, %39, %c0_i32 : i32
    scf.if %40 {
      %c0_18 = arith.constant 0 : index
      %c0_19 = arith.constant 0 : index
      %41 = vector.load %arg6[%c0_18, %c0_19] : memref<16x1xf32, #tpu.memory_space<vmem>>, vector<16x1xf32>
      %42 = vector.shape_cast %41 : vector<16x1xf32> to vector<16x1xf32>
      %43 = vector.broadcast %42 : vector<16x1xf32> to vector<16x16xf32>
      %c0_20 = arith.constant 0 : index
      %c0_21 = arith.constant 0 : index
      %c16 = arith.constant 16 : index
      %44 = vector.load %arg8[%c0_20, %c0_21, %c16] : memref<1x16x256xf32, #tpu.memory_space<vmem>>, vector<1x16x16xf32>
      %45 = vector.shape_cast %44 : vector<1x16x16xf32> to vector<16x16xf32>
      %46 = vector.shape_cast %43 : vector<16x16xf32> to vector<1x16x16xf32>
      tpu.vector_store %arg8[%c0_20, %c0_21, %c16], %46 {strides = array<i32>} : memref<1x16x256xf32, #tpu.memory_space<vmem>>, vector<1x16x16xf32>,
    } else {
    }
    return
  }
  func.func @transform_0(%arg0: i32, %arg1: i32) -> (i32, i32, i32) {
    %c0_i32 = arith.constant 0 : i32
    %0 = arith.minsi %arg1, %c0_i32 : i32
    %c0_i32_0 = arith.constant 0 : i32
    %c0_i32_1 = arith.constant 0 : i32
    return %arg0, %c0_i32_0, %0 : i32, i32, i32
  }
  func.func @transform_1(%arg0: i32, %arg1: i32) -> (i32, i32, i32, i32) {
    %c0_i32 = arith.constant 0 : i32
    %c0_i32_0 = arith.constant 0 : i32
    %c0_i32_1 = arith.constant 0 : i32
    return %arg0, %arg1, %c0_i32, %c0_i32_0 : i32, i32, i32, i32
  }
  func.func @transform_2(%arg0: i32, %arg1: i32) -> (i32, i32) {
    %c0_i32 = arith.constant 0 : i32
    %c0_i32_0 = arith.constant 0 : i32
    %c0_i32_1 = arith.constant 0 : i32
    return %c0_i32, %c0_i32_0 : i32, i32
  }
  func.func @transform_3(%arg0: i32, %arg1: i32) -> (i32, i32) {
    %c0_i32 = arith.constant 0 : i32
    %c0_i32_0 = arith.constant 0 : i32
    %c0_i32_1 = arith.constant 0 : i32
    return %c0_i32, %c0_i32_0 : i32, i32
  }
  func.func @transform_4(%arg0: i32, %arg1: i32) -> (i32, i32) {
    %c0_i32 = arith.constant 0 : i32
    %c0_i32_0 = arith.constant 0 : i32
    %c0_i32_1 = arith.constant 0 : i32
    return %c0_i32, %c0_i32_0 : i32, i32
  }
  func.func @transform_5(%arg0: i32, %arg1: i32) -> (i32, i32) {
    %c0_i32 = arith.constant 0 : i32
    %c0_i32_0 = arith.constant 0 : i32
    %c0_i32_1 = arith.constant 0 : i32
    return %c0_i32, %c0_i32_0 : i32, i32
  }
  func.func @transform_6(%arg0: i32, %arg1: i32) -> (i32, i32, i32) {
    %c0_i32 = arith.constant 0 : i32
    %c0_i32_0 = arith.constant 0 : i32
    return %arg0, %c0_i32, %arg1 : i32, i32, i32
  }
}

</mosaic_0001>

<llo_original>
// kernel: tpu_custom_call.1
$region0: #{tpu_custom_call.1}
  #allocation0 [shape = 'u32[]', space=smem, size = 0x4, offset = 0x4, fixed_abs, tag = 'smem constant byte address 0x4 - core index']
  #allocation1 [shape = 'u32[72,128]{1,0:T(1,128)}', space=vmem, size = 0x9000, scoped, tag = 'internal scratch']
  %s0 = inlined_call_operand.vmem [shape: f32[1,8,256], index: 0, kind: input, shape index: {}]
  %s1 = inlined_call_operand.vmem [shape: f32[1,2,8,16], index: 1, kind: input, shape index: {}]
  %s2 = inlined_call_operand.vmem [shape: f32[8,3], index: 2, kind: input, shape index: {}]
  %s3 = inlined_call_operand.vmem [shape: f32[16,8], index: 3, kind: input, shape index: {}]
  %s4 = inlined_call_operand.vmem [shape: f32[16,1], index: 4, kind: input, shape index: {}]
  %s5 = inlined_call_operand.vmem [shape: f32[2,256], index: 5, kind: input, shape index: {}]
  %s6 = inlined_call_operand.hbm [shape: f32[1,16,288], index: 6, kind: output, shape index: {}]
  %s7 = sld [smem:[#allocation0]]
  $region61: #{tpu_custom_call.1} parent=0
    _
  %s9 = ssub.s32 1, %s7
  %s10 = scalar_select 0, %s9, %s7
  $region1: #{tpu_custom_call.1} parent=0
    #allocation2 [shape = 'u8[32768]{0}', space=vmem, size = 0x8000, scoped, tag = 'output window, operand 0']
    #allocation3 [shape = 's32[2]{0}', space=sflag, size = 0x8, scoped, tag = 'scoped memory for tpu_custom_call.1']
    %11 = vsyncpa [#allocation3], 0
    %s12 = scalar_lea.sflag [#allocation3], 1
    %13 = vsyncpa %s12, 0
    loop: start=0, step=1, limit=4
    $region2: #{tpu_custom_call.1} parent=1 // loop_pre_header
      _
    $region3: #{tpu_custom_call.1} parent=1 // loop_header
      %s15 = sphi 0, %s19
      %p16 = scmp.ge.s32.totalorder %s15, 4
      %s22 = sphi 0, %s34
      %s23 = sphi 0, %s30
      %s24 = sphi 0, %s22
      %s25 = sphi 0, %s23
      %s26 = sphi 0, %s24
      %s27 = sphi 0, %s25
      %s43 = sphi 0, %s45
      %s46 = sphi 0, %s43
      %s47 = sphi 0, %s46
      %s63 = sphi 0, %s47
      %s71 = sphi 0, %s73
      %s74 = sphi 0, %s71
      %s75 = sphi 0, %s74
      %s91 = sphi 0, %s75
      %s95 = sphi 0, %s95
      %s97 = sphi 0, %s95
      %s98 = sphi 0, %s97
      %s112 = sphi 0, %s98
      %s116 = sphi 0, %s116
      %s118 = sphi 0, %s116
      %s119 = sphi 0, %s118
      %s133 = sphi 0, %s119
      %s137 = sphi 0, %s137
      %s139 = sphi 0, %s137
      %s140 = sphi 0, %s139
      %s154 = sphi 0, %s140
      %s158 = sphi 0, %s158
      %s160 = sphi 0, %s158
      %s161 = sphi 0, %s160
      %s175 = sphi 0, %s161
      %s183 = sphi 0, %s185
      %s186 = sphi 0, %s183
      %s187 = sphi 0, %s186
      %s203 = sphi 0, %s187
    $region4: #{tpu_custom_call.1} parent=1 // loop_header_branch
      %18 = sbr.rel (%p16) target = $region8
    $region5: #{tpu_custom_call.1} parent=1 // loop_body
      %s20 = ssub.s32 %s15, 1
      %s21 = ssub.s32 %s15, 2
      %s28 = sadd.s32 1, %s23
      %p29 = scmp.ge.s32.totalorder %s28, 2
      %s30 = scalar_select %p29, 0, %s28
      %s31 = sadd.s32 1, %s22
      %s32 = scalar_select %p29, %s31, %s22
      %p33 = scmp.ge.s32.totalorder %s32, 1
      %s34 = scalar_select %p33, 0, %s32
      %p35 = scmp.lt.s32.totalorder %s23, 0
      %s36 = scalar_select %p35, %s23, 0
      %p37 = scmp.lt.s32.totalorder %s30, 0
      %s38 = scalar_select %p37, %s30, 0
      %s39 = ssub.s32 %s22, %s34
      %s40 = ssub.s32 %s36, %s38
      %s41 = sor.u32 %s39, %s40
      %p42 = scmp.eq.s32.totalorder %s41, 0
      %s44 = sadd.s32 %s43, 1
      %s45 = scalar_select %p42, %s43, %s44
      %p48 = pneg %p42
      %p49 = scmp.eq.s32.totalorder %s15, 1
      %p50 = por %p48, %p49
      %p51 = scmp.ne.s32.totalorder %s43, %s46
      %p52 = scmp.eq.s32.totalorder %s15, 0
      %p53 = por %p51, %p52
      %p54 = scmp.ne.s32.totalorder %s43, %s46
      %p55 = scmp.eq.s32.totalorder %s20, 1
      %p56 = por %p54, %p55
      %p57 = scmp.ne.s32.totalorder %s46, %s47
      %p58 = scmp.eq.s32.totalorder %s20, 0
      %p59 = por %p57, %p58
      %p60 = scmp.ne.s32.totalorder %s46, %s47
      %p61 = scmp.eq.s32.totalorder %s21, 1
      %p62 = por %p60, %p61
      %p64 = scmp.ne.s32.totalorder %s47, %s63
      %p65 = scmp.eq.s32.totalorder %s21, 0
      %p66 = por %p64, %p65
      %s67 = ssub.s32 %s22, %s34
      %s68 = ssub.s32 %s23, %s30
      %s69 = sor.u32 %s67, %s68
      %p70 = scmp.eq.s32.totalorder %s69, 0
      %s72 = sadd.s32 %s71, 1
      %s73 = scalar_select %p70, %s71, %s72
      %p76 = pneg %p70
      %p77 = scmp.eq.s32.totalorder %s15, 1
      %p78 = por %p76, %p77
      %p79 = scmp.ne.s32.totalorder %s71, %s74
      %p80 = scmp.eq.s32.totalorder %s15, 0
      %p81 = por %p79, %p80
      %p82 = scmp.ne.s32.totalorder %s71, %s74
      %p83 = scmp.eq.s32.totalorder %s20, 1
      %p84 = por %p82, %p83
      %p85 = scmp.ne.s32.totalorder %s74, %s75
      %p86 = scmp.eq.s32.totalorder %s20, 0
      %p87 = por %p85, %p86
      %p88 = scmp.ne.s32.totalorder %s74, %s75
      %p89 = scmp.eq.s32.totalorder %s21, 1
      %p90 = por %p88, %p89
      %p92 = scmp.ne.s32.totalorder %s75, %s91
      %p93 = scmp.eq.s32.totalorder %s21, 0
      %p94 = por %p92, %p93
      %s96 = sadd.s32 %s95, 1
      %p99 = scmp.eq.s32.totalorder %s15, 1
      %p100 = scmp.ne.s32.totalorder %s95, %s97
      %p101 = scmp.eq.s32.totalorder %s15, 0
      %p102 = por %p100, %p101
      %p103 = scmp.ne.s32.totalorder %s95, %s97
      %p104 = scmp.eq.s32.totalorder %s20, 1
      %p105 = por %p103, %p104
      %p106 = scmp.ne.s32.totalorder %s97, %s98
      %p107 = scmp.eq.s32.totalorder %s20, 0
      %p108 = por %p106, %p107
      %p109 = scmp.ne.s32.totalorder %s97, %s98
      %p110 = scmp.eq.s32.totalorder %s21, 1
      %p111 = por %p109, %p110
      %p113 = scmp.ne.s32.totalorder %s98, %s112
      %p114 = scmp.eq.s32.totalorder %s21, 0
      %p115 = por %p113, %p114
      %s117 = sadd.s32 %s116, 1
      %p120 = scmp.eq.s32.totalorder %s15, 1
      %p121 = scmp.ne.s32.totalorder %s116, %s118
      %p122 = scmp.eq.s32.totalorder %s15, 0
      %p123 = por %p121, %p122
      %p124 = scmp.ne.s32.totalorder %s116, %s118
      %p125 = scmp.eq.s32.totalorder %s20, 1
      %p126 = por %p124, %p125
      %p127 = scmp.ne.s32.totalorder %s118, %s119
      %p128 = scmp.eq.s32.totalorder %s20, 0
      %p129 = por %p127, %p128
      %p130 = scmp.ne.s32.totalorder %s118, %s119
      %p131 = scmp.eq.s32.totalorder %s21, 1
      %p132 = por %p130, %p131
      %p134 = scmp.ne.s32.totalorder %s119, %s133
      %p135 = scmp.eq.s32.totalorder %s21, 0
      %p136 = por %p134, %p135
      %s138 = sadd.s32 %s137, 1
      %p141 = scmp.eq.s32.totalorder %s15, 1
      %p142 = scmp.ne.s32.totalorder %s137, %s139
      %p143 = scmp.eq.s32.totalorder %s15, 0
      %p144 = por %p142, %p143
      %p145 = scmp.ne.s32.totalorder %s137, %s139
      %p146 = scmp.eq.s32.totalorder %s20, 1
      %p147 = por %p145, %p146
      %p148 = scmp.ne.s32.totalorder %s139, %s140
      %p149 = scmp.eq.s32.totalorder %s20, 0
      %p150 = por %p148, %p149
      %p151 = scmp.ne.s32.totalorder %s139, %s140
      %p152 = scmp.eq.s32.totalorder %s21, 1
      %p153 = por %p151, %p152
      %p155 = scmp.ne.s32.totalorder %s140, %s154
      %p156 = scmp.eq.s32.totalorder %s21, 0
      %p157 = por %p155, %p156
      %s159 = sadd.s32 %s158, 1
      %p162 = scmp.eq.s32.totalorder %s15, 1
      %p163 = scmp.ne.s32.totalorder %s158, %s160
      %p164 = scmp.eq.s32.totalorder %s15, 0
      %p165 = por %p163, %p164
      %p166 = scmp.ne.s32.totalorder %s158, %s160
      %p167 = scmp.eq.s32.totalorder %s20, 1
      %p168 = por %p166, %p167
      %p169 = scmp.ne.s32.totalorder %s160, %s161
      %p170 = scmp.eq.s32.totalorder %s20, 0
      %p171 = por %p169, %p170
      %p172 = scmp.ne.s32.totalorder %s160, %s161
      %p173 = scmp.eq.s32.totalorder %s21, 1
      %p174 = por %p172, %p173
      %p176 = scmp.ne.s32.totalorder %s161, %s175
      %p177 = scmp.eq.s32.totalorder %s21, 0
      %p178 = por %p176, %p177
      %s179 = ssub.s32 %s22, %s34
      %s180 = ssub.s32 %s23, %s30
      %s181 = sor.u32 %s179, %s180
      %p182 = scmp.eq.s32.totalorder %s181, 0
      %s184 = sadd.s32 %s183, 1
      %s185 = scalar_select %p182, %s183, %s184
      %p188 = pneg %p182
      %p189 = scmp.eq.s32.totalorder %s15, 1
      %p190 = por %p188, %p189
      %p191 = scmp.ne.s32.totalorder %s183, %s186
      %p192 = scmp.eq.s32.totalorder %s15, 0
      %p193 = por %p191, %p192
      %p194 = scmp.ne.s32.totalorder %s183, %s186
      %p195 = scmp.eq.s32.totalorder %s20, 1
      %p196 = por %p194, %p195
      %p197 = scmp.ne.s32.totalorder %s186, %s187
      %p198 = scmp.eq.s32.totalorder %s20, 0
      %p199 = por %p197, %p198
      %p200 = scmp.ne.s32.totalorder %s186, %s187
      %p201 = scmp.eq.s32.totalorder %s21, 1
      %p202 = por %p200, %p201
      %p204 = scmp.ne.s32.totalorder %s187, %s203
      %p205 = scmp.eq.s32.totalorder %s21, 0
      %p206 = por %p204, %p205
      %p207 = scmp.le.s32.totalorder 1, %s15
      %p208 = scmp.lt.s32.totalorder %s15, 3
      %p209 = pnand %p207, %p208
      %p210 = pneg %p209
      // Predicated region
      $region9: #{tpu_custom_call.1} parent=5 // pred_check
        _
      $region10: #{tpu_custom_call.1} parent=5 // pred_check_branch
        %212 = sbr.rel (%p209) target = $region12
      $region11: #{tpu_custom_call.1} parent=5 // pred_region
        %s213 = ssub.s32 %s15, 1
        // Predicated region
        $region13: #{tpu_custom_call.1} parent=11 // pred_check
          %p214 = pneg %p108
        $region14: #{tpu_custom_call.1} parent=11 // pred_check_branch
          %216 = sbr.rel (%p214) target = $region16
        $region15: #{tpu_custom_call.1} parent=11 // pred_region
          _
        $region16: #{tpu_custom_call.1} parent=11 // pred_fallthru
          _
        // Predicated region
        $region17: #{tpu_custom_call.1} parent=11 // pred_check
          %p217 = pneg %p129
        $region18: #{tpu_custom_call.1} parent=11 // pred_check_branch
          %219 = sbr.rel (%p217) target = $region20
        $region19: #{tpu_custom_call.1} parent=11 // pred_region
          _
        $region20: #{tpu_custom_call.1} parent=11 // pred_fallthru
          _
        // Predicated region
        $region21: #{tpu_custom_call.1} parent=11 // pred_check
          %p220 = pneg %p150
        $region22: #{tpu_custom_call.1} parent=11 // pred_check_branch
          %222 = sbr.rel (%p220) target = $region24
        $region23: #{tpu_custom_call.1} parent=11 // pred_region
          _
        $region24: #{tpu_custom_call.1} parent=11 // pred_fallthru
          _
        // Predicated region
        $region25: #{tpu_custom_call.1} parent=11 // pred_check
          %p223 = pneg %p171
        $region26: #{tpu_custom_call.1} parent=11 // pred_check_branch
          %225 = sbr.rel (%p223) target = $region28
        $region27: #{tpu_custom_call.1} parent=11 // pred_region
          _
        $region28: #{tpu_custom_call.1} parent=11 // pred_fallthru
          _
      $region12: #{tpu_custom_call.1} parent=5 // pred_fallthru
        _
      %p226 = scmp.lt.s32.totalorder %s15, 2
      // Predicated region
      $region29: #{tpu_custom_call.1} parent=5 // pred_check
        %p227 = pneg %p226
      $region30: #{tpu_custom_call.1} parent=5 // pred_check_branch
        %229 = sbr.rel (%p227) target = $region32
      $region31: #{tpu_custom_call.1} parent=5 // pred_region
        // Predicated region
        $region33: #{tpu_custom_call.1} parent=31 // pred_check
          %p230 = pneg %p53
        $region34: #{tpu_custom_call.1} parent=31 // pred_check_branch
          %232 = sbr.rel (%p230) target = $region36
        $region35: #{tpu_custom_call.1} parent=31 // pred_region
          %p233 = scmp.lt.s32.totalorder %s23, 0
          %s234 = scalar_select %p233, %s23, 0
          %s235 = smul.u32 2, %s234
          %p236 = scmp.lt.s32.totalorder %s22, 0
          %s237 = scalar_select %p236, %s22, 0
          %p238 = scmp.lt.s32.totalorder %s235, 1
          %s239 = scalar_select %p238, %s235, 1
          %s240 = smul.addr %s237, 2
          %s241 = sadd.s32 %s239, %s240
          %s242 = smul.addr %s241, 8
          %s243 = scalar_lea.vmem %s0, %s242
          %p244 = scmp.lt.s32.totalorder %s23, 0
          %s245 = scalar_select %p244, %s23, 0
          %s246 = smul.u32 2, %s245
        $region36: #{tpu_custom_call.1} parent=31 // pred_fallthru
          _
        // Predicated region
        $region37: #{tpu_custom_call.1} parent=31 // pred_check
          %p247 = pneg %p81
        $region38: #{tpu_custom_call.1} parent=31 // pred_check_branch
          %249 = sbr.rel (%p247) target = $region40
        $region39: #{tpu_custom_call.1} parent=31 // pred_region
          %p250 = scmp.lt.s32.totalorder %s22, 0
          %s251 = scalar_select %p250, %s22, 0
          %p252 = scmp.lt.s32.totalorder %s23, 1
          %s253 = scalar_select %p252, %s23, 1
          %s254 = smul.addr %s251, 2
          %s255 = sadd.s32 %s253, %s254
          %s256 = smul.addr %s255, 8
          %s257 = scalar_lea.vmem %s1, %s256
        $region40: #{tpu_custom_call.1} parent=31 // pred_fallthru
          _
      $region32: #{tpu_custom_call.1} parent=5 // pred_fallthru
        _
      %p258 = scmp.le.s32.totalorder 1, %s15
      %p259 = scmp.lt.s32.totalorder %s15, 3
      %p260 = pnand %p258, %p259
      %p261 = pneg %p260
      // Predicated region
      $region41: #{tpu_custom_call.1} parent=5 // pred_check
        _
      $region42: #{tpu_custom_call.1} parent=5 // pred_check_branch
        %263 = sbr.rel (%p260) target = $region44
      $region43: #{tpu_custom_call.1} parent=5 // pred_region
        %s264 = ssub.s32 %s15, 1
        %p265 = scmp.lt.s32.totalorder %s25, 0
        %s266 = scalar_select %p265, %s25, 0
        %s267 = smul.u32 2, %s266
        %p268 = scmp.lt.s32.totalorder %s24, 0
        %s269 = scalar_select %p268, %s24, 0
        %p270 = scmp.lt.s32.totalorder %s267, 1
        %s271 = scalar_select %p270, %s267, 1
        %s272 = smul.addr %s269, 2
        %s273 = sadd.s32 %s271, %s272
        %s274 = smul.addr %s273, 8
        %s275 = scalar_lea.vmem %s0, %s274
        %p276 = pneg %p59
        %p277 = pneg %p56
        %p278 = scmp.lt.s32.totalorder %s24, 0
        %s279 = scalar_select %p278, %s24, 0
        %p280 = scmp.lt.s32.totalorder %s25, 1
        %s281 = scalar_select %p280, %s25, 1
        %s282 = smul.addr %s279, 2
        %s283 = sadd.s32 %s281, %s282
        %s284 = smul.addr %s283, 8
        %s285 = scalar_lea.vmem %s1, %s284
        %p286 = pneg %p87
        %p287 = pneg %p84
        %p288 = pneg %p108
        %p289 = pneg %p105
        %p290 = pneg %p129
        %p291 = pneg %p126
        %p292 = pneg %p150
        %p293 = pneg %p147
        %p294 = pneg %p171
        %p295 = pneg %p168
        %p296 = pneg %p199
        %p297 = pneg %p196
        %s298 = sand.u32 %s186, 1
        %s299 = scalar_lea.sflag [#allocation3], %s298
        %s300 = sand.u32 %s186, 1
        %s301 = smul.addr %s300, 32
        %s302 = scalar_lea.vmem [#allocation2], %s301
        %p303 = scmp.lt.s32.totalorder %s25, 0
        %s304 = scalar_select %p303, %s25, 0
        %s305 = smul.u32 2, %s304
        %p306 = scmp.lt.s32.totalorder %s24, 0
        %s307 = scalar_select %p306, %s24, 0
        %p308 = scmp.lt.s32.totalorder %s305, 1
        %s309 = scalar_select %p308, %s305, 1
        %s310 = smul.addr %s307, 2
        %s311 = sadd.s32 %s309, %s310
        %s312 = smul.addr %s311, 8
        %s313 = scalar_lea.vmem %s0, %s312
        %p314 = scmp.lt.s32.totalorder %s25, 0
        %s315 = scalar_select %p314, %s25, 0
        %s316 = smul.u32 2, %s315
        %p317 = scmp.lt.s32.totalorder %s24, 0
        %s318 = scalar_select %p317, %s24, 0
        %p319 = scmp.lt.s32.totalorder %s25, 1
        %s320 = scalar_select %p319, %s25, 1
        %s321 = smul.addr %s318, 2
        %s322 = sadd.s32 %s320, %s321
        %s323 = smul.addr %s322, 8
        %s324 = scalar_lea.vmem %s1, %s323
        %s325 = smul.u32 2, %s25
        %s326 = ssub.s32 3, %s325
        %p327 = scmp.lt.s32.totalorder %s326, 2
        %s328 = scalar_select %p327, %s326, 2
        %s329 = smul.u32 16, %s328
        %v330 = vld [vmem:[%s313] sm:$0xff]
        %v331 = vld [vmem:[%s313 + $0x8] sm:$0xff]
        %v332 = vld [vmem:[%s324] sm:$0xff]
        %335 = vrot.lane.b32.xlu0 %v330, 16
        %v336 = vpop.permute.xlu0 %335
        %337 = vrot.lane.b32.xlu0 %v331, 16
        %v338 = vpop.permute.xlu0 %337
        %vm339 = vcmask 130048
        %v340 = vsel %vm339, %v336, %v338
        %v343 = vsel %vm339, %v332, %v336
        %v344 = vld [vmem:[%s5] sm:$0xf]
        %346 = vrot.lane.b32.xlu0 %v343, 1
        %v347 = vpop.permute.xlu0 %346
        %348 = vrot.lane.b32.xlu0 %v340, 1
        %v349 = vpop.permute.xlu0 %348
        %vm350 = vcmask 7168
        %v351 = vsel %vm350, %v347, %v349
        %v354 = vsel %vm350, 0.0, %v347
        %v356 = vperm.slane %v344, 0
        %v357 = vperm.slane %v344, 2
        %v360 = vperm.slane %v356, 0
        %v361 = vperm.slane %v357, 0
        %v362 = vmul.f32 %v354, %v360
        %v363 = vmul.f32 %v351, %v361
        %364 = vrot.lane.b32.xlu0 %v343, 127
        %v365 = vpop.permute.xlu0 %364
        %366 = vrot.lane.b32.xlu0 %v340, 127
        %v367 = vpop.permute.xlu0 %366
        %vm368 = vcmask 1039360
        %v369 = vsel %vm368, %v365, %v367
        %v372 = vsel %vm368, %v367, 0.0
        %v373 = vperm.slane %v344, 1
        %v374 = vperm.slane %v344, 3
        %v377 = vperm.slane %v373, 1
        %v378 = vperm.slane %v374, 1
        %v379 = vmul.f32 %v369, %v377
        %v380 = vmul.f32 %v372, %v378
        %v381 = vld [vmem:[%s2] sm:$0xff]
        %383 = vset.pattern.permute.xlu0 0
        %384 = vperm.xlu0 %383, %v381
        %v385 = vpop.permute.xlu0 %384
        %v387 = vmul.f32 %v362, %v385
        %v388 = vmul.f32 %v363, %v385
        %389 = vset.pattern.permute.xlu0 1
        %390 = vperm.xlu0 %389, %v381
        %v391 = vpop.permute.xlu0 %390
        %v393 = vmul.f32 %v343, %v391
        %v394 = vmul.f32 %v340, %v391
        %v395 = vadd.f32 %v387, %v393
        %v396 = vadd.f32 %v388, %v394
        %397 = vset.pattern.permute.xlu0 2
        %398 = vperm.xlu0 %397, %v381
        %v399 = vpop.permute.xlu0 %398
        %v401 = vmul.f32 %v379, %v399
        %v402 = vmul.f32 %v380, %v399
        %v403 = vadd.f32 %v395, %v401
        %v404 = vadd.f32 %v396, %v402
        %v405 = vld [vmem:[%s3] sm:$0xff]
        %v406 = vld [vmem:[%s3 + $0x8] sm:$0xff]
        %v407 = vld [vmem:[%s4] sm:$0xff]
        %v408 = vld [vmem:[%s4 + $0x8] sm:$0xff]
        %410 = vset.pattern.permute.xlu0 0
        %411 = vperm.xlu0 %410, %v407
        %v412 = vpop.permute.xlu0 %411
        %415 = vset.pattern.permute.xlu0 0
        %416 = vperm.xlu0 %415, %v408
        %v417 = vpop.permute.xlu0 %416
        %vm419 = vcmask 64512
        %v421 = vsel %vm419, %v405, 0
        %v424 = vsel %vm419, %v406, 0
        %426 = vmatpush.msra.mxu0 0.0
        %427 = vmatpush.msra.mxu0 0.0
        %428 = vmatpush.msra.mxu0 0.0
        %429 = vmatpush.msra.mxu0 0.0
        %430 = vmatpush.msra.mxu0 0.0
        %431 = vmatpush.msra.mxu0 0.0
        %432 = vmatpush.msra.mxu0 0.0
        %433 = vmatpush.msra.mxu0 0.0
        %434 = vmatpush.msra.mxu0 0.0
        %435 = vmatpush.msra.mxu0 0.0
        %436 = vmatpush.msra.mxu0 0.0
        %437 = vmatpush.msra.mxu0 0.0
        %438 = vmatpush.msra.mxu0 0.0
        %439 = vmatpush.msra.mxu0 0.0
        %440 = vmatpush.msra.mxu0 0.0
        %441 = vmatpush.msra.mxu0 %v403
        %442 = vmatmul.f32.gmra.mxu0 %v421
        %v443 = vpop.f32.mrf.mxu0
        %v444 = vadd.f32 %v412, %v443
        %445 = vmatmul.f32.gmra.mxu0 %v424
        %v446 = vpop.f32.mrf.mxu0
        %v447 = vadd.f32 %v417, %v446
        %448 = vdwg.mxu0
        %449 = vmatpush.msra.mxu0 0.0
        %450 = vmatpush.msra.mxu0 0.0
        %451 = vmatpush.msra.mxu0 0.0
        %452 = vmatpush.msra.mxu0 0.0
        %453 = vmatpush.msra.mxu0 0.0
        %454 = vmatpush.msra.mxu0 0.0
        %455 = vmatpush.msra.mxu0 0.0
        %456 = vmatpush.msra.mxu0 0.0
        %457 = vmatpush.msra.mxu0 0.0
        %458 = vmatpush.msra.mxu0 0.0
        %459 = vmatpush.msra.mxu0 0.0
        %460 = vmatpush.msra.mxu0 0.0
        %461 = vmatpush.msra.mxu0 0.0
        %462 = vmatpush.msra.mxu0 0.0
        %463 = vmatpush.msra.mxu0 0.0
        %464 = vmatpush.msra.mxu0 %v404
        %465 = vmatmul.f32.gmra.mxu0 %v421
        %v466 = vpop.f32.mrf.mxu0
        %v467 = vadd.f32 %v412, %v466
        %468 = vmatmul.f32.gmra.mxu0 %v424
        %v469 = vpop.f32.mrf.mxu0
        %v470 = vadd.f32 %v417, %v469
        %471 = vdwg.mxu0
        %472 = vst [vmem:[%s302] sm:$0xff] %v444
        %473 = vst [vmem:[%s302 + $0x8] sm:$0xff] %v467
        %474 = vst [vmem:[%s302 + $0x10] sm:$0xff] %v447
        %475 = vst [vmem:[%s302 + $0x18] sm:$0xff] %v470
        %p476 = scmp.eq.s32.totalorder %s25, 1
        // Predicated region
        $region45: #{tpu_custom_call.1} parent=43 // pred_check
          %p477 = pneg %p476
        $region46: #{tpu_custom_call.1} parent=43 // pred_check_branch
          %479 = sbr.rel (%p477) target = $region48
        $region47: #{tpu_custom_call.1} parent=43 // pred_region
          %v480 = vld [vmem:[%s4] sm:$0xff]
          %v481 = vld [vmem:[%s4 + $0x8] sm:$0xff]
          %483 = vset.pattern.permute.xlu0 0
          %484 = vperm.xlu0 %483, %v480
          %v485 = vpop.permute.xlu0 %484
          %488 = vset.pattern.permute.xlu0 0
          %489 = vperm.xlu0 %488, %v481
          %v490 = vpop.permute.xlu0 %489
          %vm492 = vcmask 261248
          %493 = vst.msk [vmem:[%s302] sm:$0xff] %vm492, %v485
          %494 = vst.msk [vmem:[%s302 + $0x10] sm:$0xff] %vm492, %v490
        $region48: #{tpu_custom_call.1} parent=43 // pred_fallthru
          _
        %s495 = sand.u32 %s186, 1
        %s496 = scalar_lea.sflag [#allocation3], %s495
        %s497 = sand.u32 %s186, 1
        %s498 = smul.addr %s497, 32
        %s499 = scalar_lea.vmem [#allocation2], %s498
        // Predicated region
        $region49: #{tpu_custom_call.1} parent=43 // pred_check
          %p500 = pneg %p196
        $region50: #{tpu_custom_call.1} parent=43 // pred_check_branch
          %502 = sbr.rel (%p500) target = $region52
        $region51: #{tpu_custom_call.1} parent=43 // pred_region
          %s503 = smul.u32 2, %s25
          %s504 = ssub.s32 3, %s503
          %p505 = scmp.lt.s32.totalorder %s504, 2
          %s506 = scalar_select %p505, %s504, 2
          %s507 = smul.u32 16, %s506
          %s508 = ssub.s32 32, %s507
          %s509 = sshll.u32 %s508, 4
          %510 = vsyncadd %s496, %s509
          %p511 = scmp.ne.s32.totalorder 0, %s507
          %s512 = smul.addr %s24, 6
          %s513 = sadd.s32 %s503, %s512
          %s514 = smul.addr %s513, 8
          %s515 = scalar_lea.hbm %s6, %s514
          %s516 = smul.u32 %s506, 8
          %s517 = smul.u32 %s516, 2
          %s518 = sshll.u32 %s499, 4
          %s519 = int_to_ptr.vmem [resolvable:$true] %s518
          %s520 = sshll.u32 %s515, 4
          %s521 = int_to_ptr.hbm [resolvable:$true] %s520
          %s522 = sshll.u32 %s517, 4
          %526 = dma.vmem_to_hbm [thread:$0]  (%p511), %s519, %s522, %s521, %s496, 256, 384, %s516
        $region52: #{tpu_custom_call.1} parent=43 // pred_fallthru
          _
      $region44: #{tpu_custom_call.1} parent=5 // pred_fallthru
        _
      %p527 = scmp.le.s32.totalorder 2, %s15
      // Predicated region
      $region53: #{tpu_custom_call.1} parent=5 // pred_check
        %p528 = pneg %p527
      $region54: #{tpu_custom_call.1} parent=5 // pred_check_branch
        %530 = sbr.rel (%p528) target = $region56
      $region55: #{tpu_custom_call.1} parent=5 // pred_region
        %s531 = ssub.s32 %s15, 2
        // Predicated region
        $region57: #{tpu_custom_call.1} parent=55 // pred_check
          %p532 = pneg %p202
        $region58: #{tpu_custom_call.1} parent=55 // pred_check_branch
          %534 = sbr.rel (%p532) target = $region60
        $region59: #{tpu_custom_call.1} parent=55 // pred_region
          %s535 = sand.u32 %s187, 1
          %s536 = scalar_lea.sflag [#allocation3], %s535
          %s537 = sand.u32 %s187, 1
          %s538 = smul.addr %s537, 32
          %s539 = scalar_lea.vmem [#allocation2], %s538
          %541 = dma.done %s536, 512
        $region60: #{tpu_custom_call.1} parent=55 // pred_fallthru
          _
      $region56: #{tpu_custom_call.1} parent=5 // pred_fallthru
        _
    $region6: #{tpu_custom_call.1} parent=1 // loop_footer
      %s19 = sadd.s32 1, %s15
    $region7: #{tpu_custom_call.1} parent=1 // loop_footer_branch
      %14 = sbr.rel target = $region3
    $region8: #{tpu_custom_call.1} parent=1 // loop_exit
      _
    %542 = vsyncpa [#allocation3], 1
    %s543 = scalar_lea.sflag [#allocation3], 1
    %544 = vsyncpa %s543, 1

</llo_original>
